<compile_context>
chip_gen: v7x
topology: tpu7x:2x2x1
jax: 0.10.0
libtpu: 0.0.40
codegen_flags: <defaults>
</compile_context>

<pallas_src>
import jax
import jax.numpy as jnp
import numpy as np
from jax.experimental import pallas as pl
from jax.experimental.pallas import tpu as pltpu


def attention_kernel(q_ref, enc_ref, w1t_ref, w2t_ref, v_ref, ctx_ref, attn_ref):
    # q_ref    : (Bt, L*H)   flattened decoder hidden state (query)
    # enc_ref  : (Bt, S, E)  encoder outputs, E = 2H   (read exactly once)
    # w1t_ref  : (L*H, H)    W1^T
    # w2t_ref  : (E, H)      W2^T
    # v_ref    : (1, H)      V
    # ctx_ref  : (Bt, E)
    # attn_ref : (Bt, S)
    Bt, S, E = enc_ref.shape
    H = w1t_ref.shape[1]

    enc = enc_ref[...]                                        # (Bt, S, E)

    # Query projection: tiny (Bt, L*H) @ (L*H, H) on the MXU.
    q = jnp.dot(q_ref[...], w1t_ref[...],
                preferred_element_type=jnp.float32)           # (Bt, H)

    # Key projection reusing the same enc VMEM tile the ctx step needs.
    # (Bt, S, E) -> (Bt*S, E) only regroups sublane tile groups (S % 8 == 0
    # or S == full dim), no cross-lane movement.
    keys = jnp.dot(enc.reshape(Bt * S, E), w2t_ref[...],
                   preferred_element_type=jnp.float32)        # (Bt*S, H)
    keys = keys.reshape(Bt, S, H)

    # Additive-attention energies: tanh(q + keys) . v  -> (Bt, S)
    t = jnp.tanh(keys + q[:, None, :])                        # (Bt, S, H)
    scores = jnp.sum(t * v_ref[...], axis=-1)                 # (Bt, S)

    # Softmax over the sequence axis (numerically stable).
    m = jnp.max(scores, axis=-1, keepdims=True)
    e = jnp.exp(scores - m)
    denom = jnp.sum(e, axis=-1, keepdims=True)
    # NOTE: pl.reciprocal(..., approx=True) rides the EUP essentially for free
    # at large S; exact kept here for tight parity with the f32 reference.
    attn = e * pl.reciprocal(denom, approx=False)             # (Bt, S)
    attn_ref[...] = attn.astype(attn_ref.dtype)

    # Context vector: VPU broadcast-multiply + sublane reduce (fine for small
    # B*S; see TODO above for the MXU path at scale).
    ctx = jnp.sum(attn[:, :, None] * enc, axis=1)             # (Bt, E)
    ctx_ref[...] = ctx.astype(ctx_ref.dtype)


def prepare_attention_params(w1, w2):
    """Pre-transpose the projection weights once (cache across decode steps)."""
    # w1: (H, L*H) -> (L*H, H); w2: (H, 2H) -> (2H, H)
    return w1.T, w2.T


def _pick_batch_tile(B, S, E):
    """Batch tile: whole batch at toy sizes; at scale, a multiple of 8 sized so
    double-buffered enc tiles stay well under the 32 MiB scoped VMEM limit."""
    if B % 8 != 0:
        return B
    # ~8 MiB per f32 enc tile -> 2 buffers + outputs/scratch leave headroom.
    max_rows = max(8, (8 * 1024 * 1024) // (S * E * 4))
    bt = min(B, (max_rows // 8) * 8)
    bt = max(bt, 8)
    while B % bt != 0:
        bt -= 8
    return bt


@jax.jit
def attention_forward(hidden, encodings, w1t, w2t, v):
    """hidden: (L, B, H); encodings: (B, S, 2H); w1t: (L*H, H); w2t: (2H, H); v: (1, H)."""
    L, B, H = hidden.shape
    S, E = encodings.shape[1], encodings.shape[2]             # E = 2H
    LH = L * H

    # Flatten the query exactly as the PyTorch module does (transpose + view).
    hflat = jnp.transpose(hidden, (1, 0, 2)).reshape(B, LH)   # (B, L*H)

    Bt = _pick_batch_tile(B, S, E)
    grid = (B // Bt,)

    flops = 2 * B * (LH * H + S * E * H + S * H + S * E)
    transcendentals = B * S * (H + 1)                         # tanh + exp
    bytes_accessed = 4 * (B * LH + B * S * E + LH * H + E * H + H
                          + B * E + B * S)

    ctx, attn = pl.pallas_call(
        attention_kernel,
        out_shape=(
            jax.ShapeDtypeStruct((B, E), jnp.float32),
            jax.ShapeDtypeStruct((B, S), jnp.float32),
        ),
        grid=grid,
        in_specs=[
            pl.BlockSpec((Bt, LH), lambda i: (i, 0)),
            pl.BlockSpec((Bt, S, E), lambda i: (i, 0, 0)),
            pl.BlockSpec((LH, H), lambda i: (0, 0)),
            pl.BlockSpec((E, H), lambda i: (0, 0)),
            pl.BlockSpec((1, H), lambda i: (0, 0)),
        ],
        out_specs=(
            pl.BlockSpec((Bt, E), lambda i: (i, 0)),
            pl.BlockSpec((Bt, S), lambda i: (i, 0)),
        ),
        compiler_params=pltpu.CompilerParams(
            dimension_semantics=("parallel",),
            vmem_limit_bytes=32 * 1024 * 1024,
        ),
        cost_estimate=pl.CostEstimate(
            flops=flops,
            transcendentals=transcendentals,
            bytes_accessed=bytes_accessed,
        ),
    )(hflat, encodings, w1t, w2t, v)

    return ctx, attn


def attention_ref(hidden, encodings, w1, w2, v):
    """Pure-JAX reference mirroring the PyTorch forward (all Linears bias=False)."""
    L, B, H = hidden.shape
    hflat = jnp.transpose(hidden, (1, 0, 2)).reshape(B, L * H)
    hidden_exp = (hflat @ w1.T)[:, None, :]                   # (B, 1, H)
    keys = encodings @ w2.T                                   # (B, S, H)
    scores = (jnp.tanh(hidden_exp + keys) @ v.T)[..., 0]      # (B, S)
    attn = jax.nn.softmax(scores, axis=-1)
    ctx = jnp.einsum('bs,bse->be', attn, encodings)
    return ctx, attn


if __name__ == "__main__":
    num_layers = 2
    hidden_size = 32
    batch = 2
    seq = 8

    key = jax.random.PRNGKey(0)
    k_h, k_e, k_w1, k_w2, k_v = jax.random.split(key, 5)

    # Inputs (PyTorch conventions: hidden (L, B, H), encodings (B, S, 2H)).
    hidden = jax.random.normal(k_h, (num_layers, batch, hidden_size), jnp.float32)
    encodings = jax.random.normal(k_e, (batch, seq, 2 * hidden_size), jnp.float32)

    # Deterministic parameter init (nn.Linear default: U(-1/sqrt(fan_in), +1/sqrt(fan_in))).
    # NOTE: the source module declares bias=False for W1 / W2 / V, so no biases here.
    def linear_init(k, out_f, in_f):
        bound = 1.0 / np.sqrt(in_f)
        return jax.random.uniform(k, (out_f, in_f), jnp.float32, -bound, bound)

    w1 = linear_init(k_w1, hidden_size, num_layers * hidden_size)  # (H, L*H)
    w2 = linear_init(k_w2, hidden_size, 2 * hidden_size)           # (H, 2H)
    v = linear_init(k_v, 1, hidden_size)                           # (1, H)

    # Weight prep happens once, outside the per-step forward.
    w1t, w2t = prepare_attention_params(w1, w2)

    ctx, attn = attention_forward(hidden, encodings, w1t, w2t, v)
    jax.block_until_ready((ctx, attn))

    ctx_r, attn_r = attention_ref(hidden, encodings, w1, w2, v)
    assert ctx.shape == (batch, 2 * hidden_size)
    assert attn.shape == (batch, seq)
    np.testing.assert_allclose(np.asarray(ctx), np.asarray(ctx_r), rtol=1e-4, atol=1e-5)
    np.testing.assert_allclose(np.asarray(attn), np.asarray(attn_r), rtol=1e-4, atol=1e-5)

    print("KERNEL_OK")
</pallas_src>

<mosaic_0001>
module attributes {stable_mosaic.version = 11 : i64} {
  func.func @attention_kernel(%arg0: i32, %arg1: memref<2x64xf32, #tpu.memory_space<vmem>>, %arg2: memref<2x8x64xf32, #tpu.memory_space<vmem>>, %arg3: memref<64x32xf32, #tpu.memory_space<vmem>>, %arg4: memref<64x32xf32, #tpu.memory_space<vmem>>, %arg5: memref<1x32xf32, #tpu.memory_space<vmem>>, %arg6: memref<2x64xf32, #tpu.memory_space<vmem>>, %arg7: memref<2x8xf32, #tpu.memory_space<vmem>>) attributes {dimension_semantics = [#tpu.dimension_semantics<parallel>], iteration_bounds = array<i64: 1>, scalar_prefetch = 0 : i64, scratch_operands = 0 : i64, tpu.core_type = #tpu.core_type<tc>, window_params = [{transform_indices = @transform_0, window_bounds = array<i64: 2, 64>}, {transform_indices = @transform_1, window_bounds = array<i64: 2, 8, 64>}, {pipeline_mode = #tpu.pipeline_mode<synchronous>, transform_indices = @transform_2, window_bounds = array<i64: 64, 32>}, {pipeline_mode = #tpu.pipeline_mode<synchronous>, transform_indices = @transform_3, window_bounds = array<i64: 64, 32>}, {pipeline_mode = #tpu.pipeline_mode<synchronous>, transform_indices = @transform_4, window_bounds = array<i64: 1, 32>}, {transform_indices = @transform_5, window_bounds = array<i64: 2, 64>}, {transform_indices = @transform_6, window_bounds = array<i64: 2, 8>}]} {
    %c0 = arith.constant 0 : index
    %c0_0 = arith.constant 0 : index
    %c0_1 = arith.constant 0 : index
    %0 = vector.load %arg2[%c0, %c0_0, %c0_1] : memref<2x8x64xf32, #tpu.memory_space<vmem>>, vector<2x8x64xf32>
    %c0_2 = arith.constant 0 : index
    %c0_3 = arith.constant 0 : index
    %1 = vector.load %arg1[%c0_2, %c0_3] : memref<2x64xf32, #tpu.memory_space<vmem>>, vector<2x64xf32>
    %c0_4 = arith.constant 0 : index
    %c0_5 = arith.constant 0 : index
    %2 = vector.load %arg3[%c0_4, %c0_5] : memref<64x32xf32, #tpu.memory_space<vmem>>, vector<64x32xf32>
    %cst = arith.constant dense<0.000000e+00> : vector<2x32xf32>
    %3 = tpu.matmul %1, %2, %cst {dimension_numbers = #tpu.dot_dimension_numbers<[1], [0], [0], [1], [0, 0, 1, 1], [], []>} : vector<2x64xf32>, vector<64x32xf32>, vector<2x32xf32> -> vector<2x32xf32>
    %4 = vector.shape_cast %0 : vector<2x8x64xf32> to vector<16x64xf32>
    %c0_6 = arith.constant 0 : index
    %c0_7 = arith.constant 0 : index
    %5 = vector.load %arg4[%c0_6, %c0_7] : memref<64x32xf32, #tpu.memory_space<vmem>>, vector<64x32xf32>
    %cst_8 = arith.constant dense<0.000000e+00> : vector<16x32xf32>
    %6 = tpu.matmul %4, %5, %cst_8 {dimension_numbers = #tpu.dot_dimension_numbers<[1], [0], [0], [1], [0, 0, 1, 1], [], []>} : vector<16x64xf32>, vector<64x32xf32>, vector<16x32xf32> -> vector<16x32xf32>
    %7 = vector.shape_cast %6 : vector<16x32xf32> to vector<2x8x32xf32>
    %8 = vector.shape_cast %3 : vector<2x32xf32> to vector<2x1x32xf32>
    %9 = vector.broadcast %8 : vector<2x1x32xf32> to vector<2x8x32xf32>
    %10 = arith.addf %7, %9 : vector<2x8x32xf32>
    %11 = math.tanh %10 : vector<2x8x32xf32>
    %c0_9 = arith.constant 0 : index
    %c0_10 = arith.constant 0 : index
    %12 = vector.load %arg5[%c0_9, %c0_10] : memref<1x32xf32, #tpu.memory_space<vmem>>, vector<1x32xf32>
    %13 = vector.shape_cast %12 : vector<1x32xf32> to vector<1x1x32xf32>
    %14 = vector.broadcast %13 : vector<1x1x32xf32> to vector<2x8x32xf32>
    %15 = arith.mulf %11, %14 : vector<2x8x32xf32>
    %cst_11 = arith.constant dense<0.000000e+00> : vector<2x8xf32>
    %16 = vector.multi_reduction <add>, %15, %cst_11 [2] : vector<2x8x32xf32> to vector<2x8xf32>
    %cst_12 = arith.constant dense<0xFF800000> : vector<2xf32>
    %17 = vector.multi_reduction <maximumf>, %16, %cst_12 [1] : vector<2x8xf32> to vector<2xf32>
    %18 = vector.shape_cast %17 : vector<2xf32> to vector<2x1xf32>
    %19 = vector.broadcast %18 : vector<2x1xf32> to vector<2x8xf32>
    %20 = arith.subf %16, %19 : vector<2x8xf32>
    %21 = math.exp %20 : vector<2x8xf32>
    %cst_13 = arith.constant dense<0.000000e+00> : vector<2xf32>
    %22 = vector.multi_reduction <add>, %21, %cst_13 [1] : vector<2x8xf32> to vector<2xf32>
    %23 = vector.shape_cast %22 : vector<2xf32> to vector<2x1xf32>
    %24 = tpu.reciprocal %23 : vector<2x1xf32> -> vector<2x1xf32>
    %25 = vector.broadcast %24 : vector<2x1xf32> to vector<2x8xf32>
    %26 = arith.mulf %21, %25 : vector<2x8xf32>
    %c0_14 = arith.constant 0 : index
    %c0_15 = arith.constant 0 : index
    %27 = vector.load %arg7[%c0_14, %c0_15] : memref<2x8xf32, #tpu.memory_space<vmem>>, vector<2x8xf32>
    tpu.vector_store %arg7[%c0_14, %c0_15], %26 {strides = array<i32>} : memref<2x8xf32, #tpu.memory_space<vmem>>, vector<2x8xf32>,
    %28 = vector.shape_cast %26 : vector<2x8xf32> to vector<2x8x1xf32>
    %29 = vector.broadcast %28 : vector<2x8x1xf32> to vector<2x8x64xf32>
    %30 = arith.mulf %29, %0 : vector<2x8x64xf32>
    %cst_16 = arith.constant dense<0.000000e+00> : vector<2x64xf32>
    %31 = vector.multi_reduction <add>, %30, %cst_16 [1] : vector<2x8x64xf32> to vector<2x64xf32>
    %c0_17 = arith.constant 0 : index
    %c0_18 = arith.constant 0 : index
    %32 = vector.load %arg6[%c0_17, %c0_18] : memref<2x64xf32, #tpu.memory_space<vmem>>, vector<2x64xf32>
    tpu.vector_store %arg6[%c0_17, %c0_18], %31 {strides = array<i32>} : memref<2x64xf32, #tpu.memory_space<vmem>>, vector<2x64xf32>,
    return
  }
  func.func @transform_0(%arg0: i32) -> (i32, i32) {
    %c0_i32 = arith.constant 0 : i32
    %c0_i32_0 = arith.constant 0 : i32
    return %arg0, %c0_i32 : i32, i32
  }
  func.func @transform_1(%arg0: i32) -> (i32, i32, i32) {
    %c0_i32 = arith.constant 0 : i32
    %c0_i32_0 = arith.constant 0 : i32
    %c0_i32_1 = arith.constant 0 : i32
    return %arg0, %c0_i32, %c0_i32_0 : i32, i32, i32
  }
  func.func @transform_2(%arg0: i32) -> (i32, i32) {
    %c0_i32 = arith.constant 0 : i32
    %c0_i32_0 = arith.constant 0 : i32
    %c0_i32_1 = arith.constant 0 : i32
    return %c0_i32, %c0_i32_0 : i32, i32
  }
  func.func @transform_3(%arg0: i32) -> (i32, i32) {
    %c0_i32 = arith.constant 0 : i32
    %c0_i32_0 = arith.constant 0 : i32
    %c0_i32_1 = arith.constant 0 : i32
    return %c0_i32, %c0_i32_0 : i32, i32
  }
  func.func @transform_4(%arg0: i32) -> (i32, i32) {
    %c0_i32 = arith.constant 0 : i32
    %c0_i32_0 = arith.constant 0 : i32
    %c0_i32_1 = arith.constant 0 : i32
    return %c0_i32, %c0_i32_0 : i32, i32
  }
  func.func @transform_5(%arg0: i32) -> (i32, i32) {
    %c0_i32 = arith.constant 0 : i32
    %c0_i32_0 = arith.constant 0 : i32
    return %arg0, %c0_i32 : i32, i32
  }
  func.func @transform_6(%arg0: i32) -> (i32, i32) {
    %c0_i32 = arith.constant 0 : i32
    %c0_i32_0 = arith.constant 0 : i32
    return %arg0, %c0_i32 : i32, i32
  }
}

</mosaic_0001>

<llo_original>
// kernel: attention_forward.1
$region0: #{attention_forward.1}
  #allocation0 [shape = 'u32[]', space=smem, size = 0x4, offset = 0x4, fixed_abs, tag = 'smem constant byte address 0x4 - core index']
  #allocation1 [shape = 'u32[144,128]{1,0:T(1,128)}', space=vmem, size = 0x12000, scoped, tag = 'internal scratch']
  %s0 = inlined_call_operand.vmem [shape: f32[2,64], index: 0, kind: input, shape index: {}]
  %s1 = inlined_call_operand.vmem [shape: f32[2,8,64], index: 1, kind: input, shape index: {}]
  %s2 = inlined_call_operand.vmem [shape: f32[64,32], index: 2, kind: input, shape index: {}]
  %s3 = inlined_call_operand.vmem [shape: f32[64,32], index: 3, kind: input, shape index: {}]
  %s4 = inlined_call_operand.vmem [shape: f32[1,32], index: 4, kind: input, shape index: {}]
  %s5 = inlined_call_operand.hbm [shape: f32[2,64], index: 5, kind: output, shape index: {0}]
  %s6 = inlined_call_operand.hbm [shape: f32[2,8], index: 6, kind: output, shape index: {1}]
  %7 = xla_tuple %s5, %s6
  %s8 = sld [smem:[#allocation0]]
  $region38: #{attention_forward.1} parent=0
    _
  %s10 = ssub.s32 1, %s8
  %s11 = scalar_select 0, %s10, %s8
  $region1: #{attention_forward.1} parent=0
    #allocation2 [shape = 'u8[1024]{0}', space=vmem, size = 0x400, scoped, tag = 'output window, operand 0, single buffered']
    #allocation3 [shape = 's32[1]{0}', space=sflag, size = 0x4, scoped, tag = 'scoped memory for attention_forward.1']
    #allocation4 [shape = 'u8[1024]{0}', space=vmem, size = 0x400, scoped, tag = 'output window, operand 1, single buffered']
    #allocation5 [shape = 's32[1]{0}', space=sflag, size = 0x4, scoped, tag = 'scoped memory for attention_forward.1']
    %12 = vsyncpa [#allocation3], 0
    %13 = vsyncpa [#allocation5], 0
    // Predicated region
    $region2: #{attention_forward.1} parent=1 // pred_check
      _
    $region3: #{attention_forward.1} parent=1 // pred_check_branch
      %15 = sbr.rel (0) target = $region5
    $region4: #{attention_forward.1} parent=1 // pred_region
      _
    $region5: #{attention_forward.1} parent=1 // pred_fallthru
      _
    // Predicated region
    $region6: #{attention_forward.1} parent=1 // pred_check
      _
    $region7: #{attention_forward.1} parent=1 // pred_check_branch
      %17 = sbr.rel (0) target = $region9
    $region8: #{attention_forward.1} parent=1 // pred_region
      _
    $region9: #{attention_forward.1} parent=1 // pred_fallthru
      _
    // Predicated region
    $region10: #{attention_forward.1} parent=1 // pred_check
      _
    $region11: #{attention_forward.1} parent=1 // pred_check_branch
      %19 = sbr.rel (0) target = $region13
    $region12: #{attention_forward.1} parent=1 // pred_region
      _
    $region13: #{attention_forward.1} parent=1 // pred_fallthru
      _
    // Predicated region
    $region14: #{attention_forward.1} parent=1 // pred_check
      _
    $region15: #{attention_forward.1} parent=1 // pred_check_branch
      %21 = sbr.rel (0) target = $region17
    $region16: #{attention_forward.1} parent=1 // pred_region
      _
    $region17: #{attention_forward.1} parent=1 // pred_fallthru
      _
    // Predicated region
    $region18: #{attention_forward.1} parent=1 // pred_check
      _
    $region19: #{attention_forward.1} parent=1 // pred_check_branch
      %23 = sbr.rel (0) target = $region21
    $region20: #{attention_forward.1} parent=1 // pred_region
      _
    $region21: #{attention_forward.1} parent=1 // pred_fallthru
      _
    %v24 = vld [vmem:[%s1] sm:$0xff]
    %v25 = vld [vmem:[%s1 + $0x8] sm:$0xff]
    %v26 = vld [vmem:[%s0] sm:$0x3]
    %v27 = vld [vmem:[%s2] sm:$0xff]
    %v28 = vld [vmem:[%s2 + $0x8] sm:$0xff]
    %v29 = vld [vmem:[%s2 + $0x10] sm:$0xff]
    %v30 = vld [vmem:[%s2 + $0x18] sm:$0xff]
    %v31 = vld [vmem:[%s2 + $0x20] sm:$0xff]
    %v32 = vld [vmem:[%s2 + $0x28] sm:$0xff]
    %v33 = vld [vmem:[%s2 + $0x30] sm:$0xff]
    %v34 = vld [vmem:[%s2 + $0x38] sm:$0xff]
    %vm35 = vcmask 523264
    %v37 = vsel %vm35, %v26, 0
    %39 = vmatprep.subr.mxu0 0.0
    %40 = vmatpush1.msra.mxu0 %v27
    %41 = vmatprep.subr.mxu0 0.0
    %42 = vmatpush1.msra.mxu0 %v28
    %43 = vmatprep.subr.mxu0 0.0
    %44 = vmatpush1.msra.mxu0 %v29
    %45 = vmatprep.subr.mxu0 0.0
    %46 = vmatpush1.msra.mxu0 %v30
    %47 = vmatprep.subr.mxu0 0.0
    %48 = vmatpush1.msra.mxu0 %v31
    %49 = vmatprep.subr.mxu0 0.0
    %50 = vmatpush1.msra.mxu0 %v32
    %51 = vmatprep.subr.mxu0 0.0
    %52 = vmatpush1.msra.mxu0 %v33
    %53 = vmatprep.subr.mxu0 0.0
    %54 = vmatpush1.msra.mxu0 %v34
    %55 = vmatprep.subr.mxu0 0.0
    %56 = vmatpush1.msra.mxu0 0.0
    %57 = vmatprep.subr.mxu0 0.0
    %58 = vmatpush1.msra.mxu0 0.0
    %59 = vmatprep.subr.mxu0 0.0
    %60 = vmatpush1.msra.mxu0 0.0
    %61 = vmatprep.subr.mxu0 0.0
    %62 = vmatpush1.msra.mxu0 0.0
    %63 = vmatprep.subr.mxu0 0.0
    %64 = vmatpush1.msra.mxu0 0.0
    %65 = vmatprep.subr.mxu0 0.0
    %66 = vmatpush1.msra.mxu0 0.0
    %67 = vmatprep.subr.mxu0 0.0
    %68 = vmatpush1.msra.mxu0 0.0
    %69 = vmatprep.subr.mxu0 0.0
    %70 = vmatpush1.msra.mxu0 0.0
    %71 = vmatprep.subr.mxu0 0.0
    %72 = vmatpush1.msra.mxu0 0.0
    %73 = vmatprep.subr.mxu0 0.0
    %74 = vmatpush1.msra.mxu0 0.0
    %75 = vmatprep.subr.mxu0 0.0
    %76 = vmatpush1.msra.mxu0 0.0
    %77 = vmatprep.subr.mxu0 0.0
    %78 = vmatpush1.msra.mxu0 0.0
    %79 = vmatprep.subr.mxu0 0.0
    %80 = vmatpush1.msra.mxu0 0.0
    %81 = vmatprep.subr.mxu0 0.0
    %82 = vmatpush1.msra.mxu0 0.0
    %83 = vmatprep.subr.mxu0 0.0
    %84 = vmatpush1.msra.mxu0 0.0
    %85 = vmatprep.subr.mxu0 0.0
    %86 = vmatpush1.msra.mxu0 0.0
    %87 = vmatprep.subr.mxu0 0.0
    %88 = vmatpush1.msra.mxu0 0.0
    %89 = vmatprep.subr.mxu0 0.0
    %90 = vmatpush1.msra.mxu0 0.0
    %91 = vmatprep.subr.mxu0 0.0
    %92 = vmatpush1.msra.mxu0 0.0
    %93 = vmatprep.subr.mxu0 0.0
    %94 = vmatpush1.msra.mxu0 0.0
    %95 = vmatprep.subr.mxu0 0.0
    %96 = vmatpush1.msra.mxu0 0.0
    %97 = vmatprep.subr.mxu0 0.0
    %98 = vmatpush1.msra.mxu0 0.0
    %99 = vmatprep.subr.mxu0 0.0
    %100 = vmatpush1.msra.mxu0 0.0
    %101 = vmatprep.subr.mxu0 0.0
    %102 = vmatpush1.msra.mxu0 0.0
    %103 = vmatprep.mubr.f32.mxu0 0.0
    %104 = vmatmul.mubr.f32.gmra.mrb[0].mxu0 %v37
    %v105 = vpop.f32.mrb[0].mxu0
    %v106 = vadd.f32 0.0, %v105
    %v107 = vpop.f32.mrb[0].mxu0
    %108 = vdwg.mxu0
    %v109 = vld [vmem:[%s3] sm:$0xff]
    %v110 = vld [vmem:[%s3 + $0x8] sm:$0xff]
    %v111 = vld [vmem:[%s3 + $0x10] sm:$0xff]
    %v112 = vld [vmem:[%s3 + $0x18] sm:$0xff]
    %v113 = vld [vmem:[%s3 + $0x20] sm:$0xff]
    %v114 = vld [vmem:[%s3 + $0x28] sm:$0xff]
    %v115 = vld [vmem:[%s3 + $0x30] sm:$0xff]
    %v116 = vld [vmem:[%s3 + $0x38] sm:$0xff]
    %v118 = vsel %vm35, %v24, 0
    %v121 = vsel %vm35, %v25, 0
    %123 = vmatprep.subr.mxu0 0.0
    %124 = vmatpush1.msra.mxu0 %v109
    %125 = vmatprep.subr.mxu0 0.0
    %126 = vmatpush1.msra.mxu0 %v110
    %127 = vmatprep.subr.mxu0 0.0
    %128 = vmatpush1.msra.mxu0 %v111
    %129 = vmatprep.subr.mxu0 0.0
    %130 = vmatpush1.msra.mxu0 %v112
    %131 = vmatprep.subr.mxu0 0.0
    %132 = vmatpush1.msra.mxu0 %v113
    %133 = vmatprep.subr.mxu0 0.0
    %134 = vmatpush1.msra.mxu0 %v114
    %135 = vmatprep.subr.mxu0 0.0
    %136 = vmatpush1.msra.mxu0 %v115
    %137 = vmatprep.subr.mxu0 0.0
    %138 = vmatpush1.msra.mxu0 %v116
    %139 = vmatprep.subr.mxu0 0.0
    %140 = vmatpush1.msra.mxu0 0.0
    %141 = vmatprep.subr.mxu0 0.0
    %142 = vmatpush1.msra.mxu0 0.0
    %143 = vmatprep.subr.mxu0 0.0
    %144 = vmatpush1.msra.mxu0 0.0
    %145 = vmatprep.subr.mxu0 0.0
    %146 = vmatpush1.msra.mxu0 0.0
    %147 = vmatprep.subr.mxu0 0.0
    %148 = vmatpush1.msra.mxu0 0.0
    %149 = vmatprep.subr.mxu0 0.0
    %150 = vmatpush1.msra.mxu0 0.0
    %151 = vmatprep.subr.mxu0 0.0
    %152 = vmatpush1.msra.mxu0 0.0
    %153 = vmatprep.subr.mxu0 0.0
    %154 = vmatpush1.msra.mxu0 0.0
    %155 = vmatprep.subr.mxu0 0.0
    %156 = vmatpush1.msra.mxu0 0.0
    %157 = vmatprep.subr.mxu0 0.0
    %158 = vmatpush1.msra.mxu0 0.0
    %159 = vmatprep.subr.mxu0 0.0
    %160 = vmatpush1.msra.mxu0 0.0
    %161 = vmatprep.subr.mxu0 0.0
    %162 = vmatpush1.msra.mxu0 0.0
    %163 = vmatprep.subr.mxu0 0.0
    %164 = vmatpush1.msra.mxu0 0.0
    %165 = vmatprep.subr.mxu0 0.0
    %166 = vmatpush1.msra.mxu0 0.0
    %167 = vmatprep.subr.mxu0 0.0
    %168 = vmatpush1.msra.mxu0 0.0
    %169 = vmatprep.subr.mxu0 0.0
    %170 = vmatpush1.msra.mxu0 0.0
    %171 = vmatprep.subr.mxu0 0.0
    %172 = vmatpush1.msra.mxu0 0.0
    %173 = vmatprep.subr.mxu0 0.0
    %174 = vmatpush1.msra.mxu0 0.0
    %175 = vmatprep.subr.mxu0 0.0
    %176 = vmatpush1.msra.mxu0 0.0
    %177 = vmatprep.subr.mxu0 0.0
    %178 = vmatpush1.msra.mxu0 0.0
    %179 = vmatprep.subr.mxu0 0.0
    %180 = vmatpush1.msra.mxu0 0.0
    %181 = vmatprep.subr.mxu0 0.0
    %182 = vmatpush1.msra.mxu0 0.0
    %183 = vmatprep.subr.mxu0 0.0
    %184 = vmatpush1.msra.mxu0 0.0
    %185 = vmatprep.subr.mxu0 0.0
    %186 = vmatpush1.msra.mxu0 0.0
    %187 = vmatprep.mubr.f32.mxu0 0.0
    %188 = vmatmul.mubr.f32.gmra.mrb[0].mxu0 %v118
    %v189 = vpop.f32.mrb[0].mxu0
    %v190 = vadd.f32 0.0, %v189
    %v191 = vpop.f32.mrb[0].mxu0
    %192 = vmatprep.mubr.f32.mxu0 0.0
    %193 = vmatmul.mubr.f32.gmra.mrb[0].mxu0 %v121
    %v194 = vpop.f32.mrb[0].mxu0
    %v195 = vadd.f32 0.0, %v194
    %v196 = vpop.f32.mrb[0].mxu0
    %197 = vdwg.mxu0
    %v200 = vunpack.c.l.s4 1966171168
    %v201 = vunpack.c.0.s8 %v200
    %v202 = vlaneseq
    %v203 = vshrl.u32 %v202, 7
    %v204 = vsub.s32 %v201, %v203
    %v205 = vrot.slane %v106, %v204
    %v206 = vcombine.high %v205, %v205
    %v208 = vunpack.c.l.s4 1966171168
    %v209 = vunpack.c.0.s8 %v208
    %v210 = vlaneseq
    %v211 = vshrl.u32 %v210, 7
    %v212 = vsub.s32 %v209, %v211
    %v213 = vrot.slane %v205, %v212
    %v215 = vunpack.c.l.s4 1966171168
    %v216 = vunpack.c.0.s8 %v215
    %v217 = vlaneseq
    %v218 = vshrl.u32 %v217, 7
    %v219 = vsub.s32 %v216, %v218
    %v220 = vrot.slane %v206, %v219
    %v221 = vlaneseq
    %v222 = vshrl.u32 %v221, 7
    %v223 = vsub.s32 0, %v222
    %v224 = vrot.slane %v213, %v223
    %v225 = vlaneseq
    %v226 = vshrl.u32 %v225, 7
    %v227 = vsub.s32 0, %v226
    %v228 = vrot.slane %v220, %v227
    %v231 = vadd.f32 %v190, %v224
    %v232 = vadd.f32 %v195, %v228
    %v233 = vtanh.pop %v231
    %v234 = vtanh.pop %v232
    %v235 = vld [vmem:[%s4] sm:$0x1]
    %v237 = vlaneseq
    %v238 = vshrl.u32 %v237, 7
    %v239 = vsub.s32 0, %v238
    %v240 = vrot.slane %v235, %v239
    %v242 = vmul.f32 %v233, %v240
    %v243 = vmul.f32 %v234, %v240
    %vm244 = vcmask 261120
    %v245 = vsel %vm244, %v242, 0.0
    %246 = vadd.xlane.f32.xlu0 %v245
    %v247 = vpop.xlane.xlu0 %246
    %v248 = vsel %vm244, %v243, 0.0
    %249 = vadd.xlane.f32.xlu0 %v248
    %v250 = vpop.xlane.xlu0 %249
    %v253 = vlaneseq
    %v254 = vand.u32 %v253, 127
    %v255 = vlaneseq
    %v256 = vshrl.u32 %v255, 7
    %v257 = vsub.s32 %v254, %v256
    %v258 = vrot.slane %v247, %v257
    %v259 = vlaneseq
    %v260 = vshrl.u32 %v259, 7
    %v261 = vsub.s32 %v254, %v260
    %v262 = vrot.slane %v250, %v261
    %vm263 = vcmask 1041409
    %v264 = vsel %vm263, %v262, %v258
    %vm266 = vcmask 58368
    %v267 = vsel %vm266, %v264, -inf
    %268 = vmax.xlane.f32.xlu0 %v267
    %v269 = vpop.xlane.xlu0 %268
    %v271 = vlaneseq
    %v272 = vshrl.u32 %v271, 7
    %v273 = vsub.s32 0, %v272
    %v274 = vrot.slane %v269, %v273
    %v275 = vlaneseq
    %v276 = vshrl.u32 %v275, 7
    %v277 = vsub.s32 1, %v276
    %v278 = vrot.slane %v269, %v277
    %v281 = vsub.f32 %v247, %v274
    %v282 = vsub.f32 %v250, %v278
    %v283 = vmul.f32 %v281, 1.442695
    %v284 = vpow.pop %v283
    %v285 = vmul.f32 %v282, 1.442695
    %v286 = vpow.pop %v285
    %289 = vset.pattern.permute.xlu0 0
    %290 = vperm.xlu0 %289, %v284
    %v291 = vpop.permute.xlu0 %290
    %292 = vset.pattern.permute.xlu0 0
    %293 = vperm.xlu0 %292, %v286
    %v294 = vpop.permute.xlu0 %293
    %v295 = vlaneseq
    %v296 = vshrl.u32 %v295, 7
    %v297 = vsub.s32 %v254, %v296
    %v298 = vrot.slane %v291, %v297
    %v299 = vlaneseq
    %v300 = vshrl.u32 %v299, 7
    %v301 = vsub.s32 %v254, %v300
    %v302 = vrot.slane %v294, %v301
    %v303 = vsel %vm263, %v302, %v298
    %v305 = vsel %vm266, %v303, 0.0
    %306 = vadd.xlane.f32.xlu0 %v305
    %v307 = vpop.xlane.xlu0 %306
    %v308 = vrcp.pop %v307
    %v310 = vlaneseq
    %v311 = vshrl.u32 %v310, 7
    %v312 = vsub.s32 0, %v311
    %v313 = vrot.slane %v308, %v312
    %v314 = vlaneseq
    %v315 = vshrl.u32 %v314, 7
    %v316 = vsub.s32 1, %v315
    %v317 = vrot.slane %v308, %v316
    %v320 = vmul.f32 %v284, %v313
    %v321 = vmul.f32 %v286, %v317
    %324 = vset.pattern.permute.xlu0 0
    %325 = vperm.xlu0 %324, %v320
    %v326 = vpop.permute.xlu0 %325
    %327 = vset.pattern.permute.xlu0 0
    %328 = vperm.xlu0 %327, %v321
    %v329 = vpop.permute.xlu0 %328
    %v330 = vlaneseq
    %v331 = vshrl.u32 %v330, 7
    %v332 = vsub.s32 %v254, %v331
    %v333 = vrot.slane %v326, %v332
    %v334 = vlaneseq
    %v335 = vshrl.u32 %v334, 7
    %v336 = vsub.s32 %v254, %v335
    %v337 = vrot.slane %v329, %v336
    %v338 = vsel %vm263, %v337, %v333
    %340 = vst.msk [vmem:[#allocation4] sm:$0x3] %vm266, %v338
    %v343 = vmul.f32 %v326, %v24
    %v344 = vmul.f32 %v329, %v25
    %v345 = vsel %vm35, %v343, 0.0
    %v346 = vrot.slane %v345, 4
    %v347 = vadd.f32 %v345, %v346
    %v348 = vrot.slane %v347, 2
    %v349 = vadd.f32 %v347, %v348
    %v350 = vrot.slane %v349, 1
    %v351 = vadd.f32 %v349, %v350
    %v352 = vsel %vm35, %v344, 0.0
    %v353 = vrot.slane %v352, 4
    %v354 = vadd.f32 %v352, %v353
    %v355 = vrot.slane %v354, 2
    %v356 = vadd.f32 %v354, %v355
    %v357 = vrot.slane %v356, 1
    %v358 = vadd.f32 %v356, %v357
    %v361 = vsel %vm263, %v358, %v351
    %vm363 = vcmask 517120
    %364 = vst.msk [vmem:[#allocation2] sm:$0x3] %vm363, %v361
    // Predicated region
    $region22: #{attention_forward.1} parent=1 // pred_check
      _
    $region23: #{attention_forward.1} parent=1 // pred_check_branch
      %366 = sbr.rel (0) target = $region25
    $region24: #{attention_forward.1} parent=1 // pred_region
      %s368 = ssub.s32 32, 32
      %369 = vsyncadd [#allocation3], %s368
      %s371 = sshll.u32 [#allocation2], 4
      %s372 = int_to_ptr.vmem [resolvable:$true] %s371
      %374 = dma.vmem_to_hbm [thread:$0]  %s372, 32, %s5, [#allocation3]
    $region25: #{attention_forward.1} parent=1 // pred_fallthru
      _
    // Predicated region
    $region26: #{attention_forward.1} parent=1 // pred_check
      _
    $region27: #{attention_forward.1} parent=1 // pred_check_branch
      %376 = sbr.rel (0) target = $region29
    $region28: #{attention_forward.1} parent=1 // pred_region
      %s378 = ssub.s32 32, 32
      %379 = vsyncadd [#allocation5], %s378
      %s381 = sshll.u32 [#allocation4], 4
      %s382 = int_to_ptr.vmem [resolvable:$true] %s381
      %384 = dma.vmem_to_hbm [thread:$0]  %s382, 32, %s6, [#allocation5]
    $region29: #{attention_forward.1} parent=1 // pred_fallthru
      _
    // Predicated region
    $region30: #{attention_forward.1} parent=1 // pred_check
      _
    $region31: #{attention_forward.1} parent=1 // pred_check_branch
      %386 = sbr.rel (0) target = $region33
    $region32: #{attention_forward.1} parent=1 // pred_region
      %387 = dma.done [#allocation3], 32
    $region33: #{attention_forward.1} parent=1 // pred_fallthru
      _
    // Predicated region
    $region34: #{attention_forward.1} parent=1 // pred_check
      _
    $region35: #{attention_forward.1} parent=1 // pred_check_branch
      %389 = sbr.rel (0) target = $region37
    $region36: #{attention_forward.1} parent=1 // pred_region
      %390 = dma.done [#allocation5], 32
    $region37: #{attention_forward.1} parent=1 // pred_fallthru
      _
    %391 = vsyncpa [#allocation3], 1
    %392 = vsyncpa [#allocation5], 1

</llo_original>
